<compile_context>
chip_gen: v7x
topology: tpu7x:2x2x1
jax: 0.10.0
libtpu: 0.0.40
codegen_flags: <defaults>
</compile_context>

<pallas_src>
import functools
import math

import jax
import jax.numpy as jnp
from jax.experimental import pallas as pl
from jax.experimental.pallas import tpu as pltpu

_VMEM = pl.BlockSpec(memory_space=pltpu.MemorySpace.VMEM)


# ----------------------------------------------------------------------------
# Fused forward kernel.
# ----------------------------------------------------------------------------
def _cnn_fused_kernel(x1_ref, x2_ref, wt1_ref, wt2_ref, w1_ref, b1_ref,
                      w2_ref, b2_ref, out_ref, xp1_ref, xp2_ref, h_ref,
                      *, K, padding_l, T, S1, S2, C, L1, L2):
    """Whole CNN forward in one kernel; everything stays VMEM-resident.

    x*_ref  : (T, S*C)       lane-dense conv activations (channel-fastest cols)
    wt*_ref : (L*K, S*C)     softmaxed taps, expanded per channel and tiled over
                             S; row index = layer*K + k
    w1_ref  : (S1+S2, D)     fc1 weight (pre-transposed),  b1_ref: (1, D)
    w2_ref  : (D, NC)        fc2 weight (pre-transposed),  b2_ref: (1, NC)
    out_ref : (T, NC)
    xp*_ref : (T+K-1, S*C)   VMEM scratch: zero-padded activations (in-kernel pad)
    h_ref   : (T, S1+S2)     VMEM scratch: pooled + concatenated fc1 input
    """

    def run_stream(x_ref, wt_ref, xp_ref, n_layers, S, col_off):
        # In-kernel zero padding along T.  Pad rows [0, padding_l) and
        # [padding_l+T, T+K-1) are written once and stay zero for all layers.
        xp_ref[...] = jnp.zeros(xp_ref.shape, jnp.float32)
        xp_ref[padding_l:padding_l + T, :] = x_ref[...]

        # out[t, s*C+c] = sum_k softmax_k(w)[head(c), k] * x[t - padding_l + k, s, c]
        for layer in range(n_layers):              # static -> fully unrolled
            acc = jnp.zeros((T, S * C), jnp.float32)
            for k in range(K):                     # static -> fully unrolled
                row = layer * K + k
                w_k = wt_ref[row:row + 1, :]                       # (1, S*C)
                acc = acc + w_k * xp_ref[k:k + T, :]               # shifted window
            xp_ref[padding_l:padding_l + T, :] = acc               # feeds next layer

        # Channel max-pool (== F.max_pool1d over the full channel dim):
        # each contiguous group of C lanes reduces to one lane of the fc1 input.
        for s in range(S):
            seg = xp_ref[padding_l:padding_l + T, s * C:(s + 1) * C]   # (T, C)
            h_ref[:, col_off + s:col_off + s + 1] = jnp.max(seg, axis=1,
                                                            keepdims=True)

    run_stream(x1_ref, wt1_ref, xp1_ref, L1, S1, 0)
    run_stream(x2_ref, wt2_ref, xp2_ref, L2, S2, S1)

    # fc1 on the concatenated pooled features (single MXU dot), then fc2.
    # TODO(synk): self.dropout between fc1 and fc2 is a training-time stochastic
    #             op; implemented as identity (eval mode).
    h = h_ref[...]                                                  # (T, S1+S2)
    z = jnp.dot(h, w1_ref[...], preferred_element_type=jnp.float32) + b1_ref[...]
    out_ref[...] = (jnp.dot(z, w2_ref[...], preferred_element_type=jnp.float32)
                    + b2_ref[...])


# ----------------------------------------------------------------------------
# Parameter prep (hoisted out of the kernel): softmax over taps, per-head ->
# per-channel expansion (channel c uses head c // R, fairseq blocked grouping),
# and tiling over S so taps line up with the lane-dense (T, S*C) layout.
# ----------------------------------------------------------------------------
def _prep_conv_taps(conv_weights_hk, num_heads, C, S, weight_softmax):
    R = C // num_heads
    taps = []
    for w_hk in conv_weights_hk:                   # each (H, K)
        w = w_hk.astype(jnp.float32)
        if weight_softmax:
            w = jax.nn.softmax(w, axis=1)          # softmax over kernel taps
        w_kc = jnp.transpose(jnp.repeat(w, R, axis=0))     # (K, C)
        taps.append(jnp.tile(w_kc, (1, S)))                # (K, S*C)
    if not taps:                                   # stream with zero conv layers
        return jnp.zeros((1, S * C), jnp.float32)
    return jnp.concatenate(taps, axis=0)           # (L*K, S*C)


def cnn_forward(params, x1, x2, *, kernel_size, padding_l, num_heads,
                weight_softmax):
    K = kernel_size
    assert 0 <= padding_l <= K - 1, "padding_l must lie in [0, kernel_size - 1]"
    T, S1, C = x1.shape
    T2, S2, C2 = x2.shape
    assert T2 == T and C2 == C and C % num_heads == 0
    L1, L2 = len(params["conv1"]), len(params["conv2"])
    NC = params["w2"].shape[1]
    assert params["w1"].shape[0] == S1 + S2

    # Lane-dense flattening: (T, S, C) -> (T, S*C), channel fastest.
    x1f = x1.astype(jnp.float32).reshape(T, S1 * C)
    x2f = x2.astype(jnp.float32).reshape(T, S2 * C)
    wt1 = _prep_conv_taps(params["conv1"], num_heads, C, S1, weight_softmax)
    wt2 = _prep_conv_taps(params["conv2"], num_heads, C, S2, weight_softmax)

    kernel = functools.partial(_cnn_fused_kernel, K=K, padding_l=padding_l,
                               T=T, S1=S1, S2=S2, C=C, L1=L1, L2=L2)
    return pl.pallas_call(
        kernel,
        out_shape=jax.ShapeDtypeStruct((T, NC), jnp.float32),
        in_specs=[_VMEM] * 8,
        out_specs=_VMEM,
        scratch_shapes=[
            pltpu.VMEM((T + K - 1, S1 * C), jnp.float32),   # padded stream-1 acts
            pltpu.VMEM((T + K - 1, S2 * C), jnp.float32),   # padded stream-2 acts
            pltpu.VMEM((T, S1 + S2), jnp.float32),          # pooled concat (fc1 in)
        ],
    )(x1f, x2f, wt1, wt2, params["w1"], params["b1"], params["w2"], params["b2"])


# ----------------------------------------------------------------------------
# Parameter init (deterministic, mirrors the PyTorch init schemes).
# Conv weights are stored raw as (H, K); the softmax/expansion happens in the
# wrapper (outside the kernel).
# ----------------------------------------------------------------------------
def init_params(key, args, input_size, kernel_size, num_heads):
    H, K = num_heads, kernel_size
    n_conv = args["con1_layers"] + args["con2_layers"]
    keys = jax.random.split(key, n_conv + 4)

    # xavier_uniform_ on a (H, 1, K) tensor: fan_in = K, fan_out = H * K
    xav = math.sqrt(6.0 / (K + H * K))
    conv1 = [jax.random.uniform(keys[i], (H, K), jnp.float32, -xav, xav)
             for i in range(args["con1_layers"])]
    conv2 = [jax.random.uniform(keys[args["con1_layers"] + i], (H, K),
                                jnp.float32, -xav, xav)
             for i in range(args["con2_layers"])]

    in1 = args["seq_length_1"] + args["seq_length_2"]
    d, nc = args["output_dim"], args["class_num"]
    b1_bound = 1.0 / math.sqrt(in1)
    b2_bound = 1.0 / math.sqrt(d)
    w1 = jax.random.uniform(keys[n_conv + 0], (in1, d), jnp.float32, -b1_bound, b1_bound)
    b1 = jax.random.uniform(keys[n_conv + 1], (1, d), jnp.float32, -b1_bound, b1_bound)
    w2 = jax.random.uniform(keys[n_conv + 2], (d, nc), jnp.float32, -b2_bound, b2_bound)
    b2 = jax.random.uniform(keys[n_conv + 3], (1, nc), jnp.float32, -b2_bound, b2_bound)
    return {"conv1": conv1, "conv2": conv2, "w1": w1, "b1": b1, "w2": w2, "b2": b2}


# ----------------------------------------------------------------------------
# Pure-JAX reference (for correctness verification only).
# ----------------------------------------------------------------------------
def _reference_forward(params, x1, x2, *, kernel_size, padding_l, num_heads,
                       weight_softmax):
    def conv_stack(x, weights):
        T = x.shape[0]
        C = x.shape[2]
        R = C // num_heads
        for w_hk in weights:
            w = jax.nn.softmax(w_hk, axis=1) if weight_softmax else w_hk
            w_kc = jnp.transpose(jnp.repeat(w, R, axis=0))           # (K, C)
            xpad = jnp.pad(x, ((padding_l, kernel_size - 1 - padding_l),
                               (0, 0), (0, 0)))
            x = sum(w_kc[k][None, None, :] * xpad[k:k + T]
                    for k in range(kernel_size))
        return x

    y1 = conv_stack(x1.astype(jnp.float32), params["conv1"])
    y2 = conv_stack(x2.astype(jnp.float32), params["conv2"])
    h = jnp.concatenate([jnp.max(y1, axis=2), jnp.max(y2, axis=2)], axis=1)
    z = jnp.dot(h, params["w1"], precision=jax.lax.Precision.HIGHEST) + params["b1"]
    return jnp.dot(z, params["w2"], precision=jax.lax.Precision.HIGHEST) + params["b2"]


if __name__ == "__main__":
    # Synthetic config (the "args" of the PyTorch module).
    args = dict(con1_layers=2, con2_layers=2,
                seq_length_1=6, seq_length_2=10,
                output_dim=16, class_num=3, dropout=0.0)
    input_size = 8      # C (channels)
    kernel_size = 3     # K
    padding_l = 1
    num_heads = 2
    weight_softmax = True
    T = 8               # dim 0 shared by x1 and x2 (acts as the batch for fc1/fc2)

    key = jax.random.PRNGKey(0)
    kp, kx1, kx2 = jax.random.split(key, 3)
    params = init_params(kp, args, input_size, kernel_size, num_heads)

    x1 = jax.random.normal(kx1, (T, args["seq_length_1"], input_size), jnp.float32)
    x2 = jax.random.normal(kx2, (T, args["seq_length_2"], input_size), jnp.float32)

    fwd = jax.jit(functools.partial(cnn_forward,
                                    kernel_size=kernel_size,
                                    padding_l=padding_l,
                                    num_heads=num_heads,
                                    weight_softmax=weight_softmax))
    logits = fwd(params, x1, x2)
    jax.block_until_ready(logits)
    assert logits.shape == (T, args["class_num"]) and logits.dtype == jnp.float32

    ref = _reference_forward(params, x1, x2, kernel_size=kernel_size,
                             padding_l=padding_l, num_heads=num_heads,
                             weight_softmax=weight_softmax)
    err = float(jnp.max(jnp.abs(logits - ref)))
    assert err < 1e-3, f"mismatch vs reference, max abs err = {err}"
    print("KERNEL_OK")
</pallas_src>

<mosaic_0001>
module attributes {stable_mosaic.version = 11 : i64} {
  func.func @_cnn_fused_kernel(%arg0: memref<8x48xf32, #tpu.memory_space<vmem>>, %arg1: memref<8x80xf32, #tpu.memory_space<vmem>>, %arg2: memref<6x48xf32, #tpu.memory_space<vmem>>, %arg3: memref<6x80xf32, #tpu.memory_space<vmem>>, %arg4: memref<16x16xf32, #tpu.memory_space<vmem>>, %arg5: memref<1x16xf32, #tpu.memory_space<vmem>>, %arg6: memref<16x3xf32, #tpu.memory_space<vmem>>, %arg7: memref<1x3xf32, #tpu.memory_space<vmem>>, %arg8: memref<8x3xf32, #tpu.memory_space<vmem>>, %arg9: memref<10x48xf32, #tpu.memory_space<vmem>>, %arg10: memref<10x80xf32, #tpu.memory_space<vmem>>, %arg11: memref<8x16xf32, #tpu.memory_space<vmem>>) attributes {dimension_semantics = [], scalar_prefetch = 0 : i64, scratch_operands = 3 : i64, tpu.core_type = #tpu.core_type<tc>} {
    %cst = arith.constant 0.000000e+00 : f32
    %0 = vector.broadcast %cst : f32 to vector<10x48xf32>
    %c0 = arith.constant 0 : index
    %c0_0 = arith.constant 0 : index
    %1 = vector.load %arg9[%c0, %c0_0] : memref<10x48xf32, #tpu.memory_space<vmem>>, vector<10x48xf32>
    tpu.vector_store %arg9[%c0, %c0_0], %0 {strides = array<i32>} : memref<10x48xf32, #tpu.memory_space<vmem>>, vector<10x48xf32>,
    %c0_1 = arith.constant 0 : index
    %c0_2 = arith.constant 0 : index
    %2 = vector.load %arg0[%c0_1, %c0_2] : memref<8x48xf32, #tpu.memory_space<vmem>>, vector<8x48xf32>
    %c1 = arith.constant 1 : index
    %c0_3 = arith.constant 0 : index
    %3 = vector.load %arg9[%c1, %c0_3] : memref<10x48xf32, #tpu.memory_space<vmem>>, vector<8x48xf32>
    tpu.vector_store %arg9[%c1, %c0_3], %2 {strides = array<i32>} : memref<10x48xf32, #tpu.memory_space<vmem>>, vector<8x48xf32>,
    %cst_4 = arith.constant 0.000000e+00 : f32
    %4 = vector.broadcast %cst_4 : f32 to vector<8x48xf32>
    %c0_5 = arith.constant 0 : index
    %c0_6 = arith.constant 0 : index
    %5 = vector.load %arg2[%c0_5, %c0_6] : memref<6x48xf32, #tpu.memory_space<vmem>>, vector<1x48xf32>
    %c0_7 = arith.constant 0 : index
    %c0_8 = arith.constant 0 : index
    %6 = vector.load %arg9[%c0_7, %c0_8] : memref<10x48xf32, #tpu.memory_space<vmem>>, vector<8x48xf32>
    %7 = vector.broadcast %5 : vector<1x48xf32> to vector<8x48xf32>
    %8 = arith.mulf %7, %6 : vector<8x48xf32>
    %9 = arith.addf %4, %8 : vector<8x48xf32>
    %c1_9 = arith.constant 1 : index
    %c0_10 = arith.constant 0 : index
    %10 = vector.load %arg2[%c1_9, %c0_10] : memref<6x48xf32, #tpu.memory_space<vmem>>, vector<1x48xf32>
    %c1_11 = arith.constant 1 : index
    %c0_12 = arith.constant 0 : index
    %11 = vector.load %arg9[%c1_11, %c0_12] : memref<10x48xf32, #tpu.memory_space<vmem>>, vector<8x48xf32>
    %12 = vector.broadcast %10 : vector<1x48xf32> to vector<8x48xf32>
    %13 = arith.mulf %12, %11 : vector<8x48xf32>
    %14 = arith.addf %9, %13 : vector<8x48xf32>
    %c2 = arith.constant 2 : index
    %c0_13 = arith.constant 0 : index
    %15 = vector.load %arg2[%c2, %c0_13] : memref<6x48xf32, #tpu.memory_space<vmem>>, vector<1x48xf32>
    %c2_14 = arith.constant 2 : index
    %c0_15 = arith.constant 0 : index
    %16 = vector.load %arg9[%c2_14, %c0_15] : memref<10x48xf32, #tpu.memory_space<vmem>>, vector<8x48xf32>
    %17 = vector.broadcast %15 : vector<1x48xf32> to vector<8x48xf32>
    %18 = arith.mulf %17, %16 : vector<8x48xf32>
    %19 = arith.addf %14, %18 : vector<8x48xf32>
    %c1_16 = arith.constant 1 : index
    %c0_17 = arith.constant 0 : index
    %20 = vector.load %arg9[%c1_16, %c0_17] : memref<10x48xf32, #tpu.memory_space<vmem>>, vector<8x48xf32>
    tpu.vector_store %arg9[%c1_16, %c0_17], %19 {strides = array<i32>} : memref<10x48xf32, #tpu.memory_space<vmem>>, vector<8x48xf32>,
    %cst_18 = arith.constant 0.000000e+00 : f32
    %21 = vector.broadcast %cst_18 : f32 to vector<8x48xf32>
    %c3 = arith.constant 3 : index
    %c0_19 = arith.constant 0 : index
    %22 = vector.load %arg2[%c3, %c0_19] : memref<6x48xf32, #tpu.memory_space<vmem>>, vector<1x48xf32>
    %c0_20 = arith.constant 0 : index
    %c0_21 = arith.constant 0 : index
    %23 = vector.load %arg9[%c0_20, %c0_21] : memref<10x48xf32, #tpu.memory_space<vmem>>, vector<8x48xf32>
    %24 = vector.broadcast %22 : vector<1x48xf32> to vector<8x48xf32>
    %25 = arith.mulf %24, %23 : vector<8x48xf32>
    %26 = arith.addf %21, %25 : vector<8x48xf32>
    %c4 = arith.constant 4 : index
    %c0_22 = arith.constant 0 : index
    %27 = vector.load %arg2[%c4, %c0_22] : memref<6x48xf32, #tpu.memory_space<vmem>>, vector<1x48xf32>
    %c1_23 = arith.constant 1 : index
    %c0_24 = arith.constant 0 : index
    %28 = vector.load %arg9[%c1_23, %c0_24] : memref<10x48xf32, #tpu.memory_space<vmem>>, vector<8x48xf32>
    %29 = vector.broadcast %27 : vector<1x48xf32> to vector<8x48xf32>
    %30 = arith.mulf %29, %28 : vector<8x48xf32>
    %31 = arith.addf %26, %30 : vector<8x48xf32>
    %c5 = arith.constant 5 : index
    %c0_25 = arith.constant 0 : index
    %32 = vector.load %arg2[%c5, %c0_25] : memref<6x48xf32, #tpu.memory_space<vmem>>, vector<1x48xf32>
    %c2_26 = arith.constant 2 : index
    %c0_27 = arith.constant 0 : index
    %33 = vector.load %arg9[%c2_26, %c0_27] : memref<10x48xf32, #tpu.memory_space<vmem>>, vector<8x48xf32>
    %34 = vector.broadcast %32 : vector<1x48xf32> to vector<8x48xf32>
    %35 = arith.mulf %34, %33 : vector<8x48xf32>
    %36 = arith.addf %31, %35 : vector<8x48xf32>
    %c1_28 = arith.constant 1 : index
    %c0_29 = arith.constant 0 : index
    %37 = vector.load %arg9[%c1_28, %c0_29] : memref<10x48xf32, #tpu.memory_space<vmem>>, vector<8x48xf32>
    tpu.vector_store %arg9[%c1_28, %c0_29], %36 {strides = array<i32>} : memref<10x48xf32, #tpu.memory_space<vmem>>, vector<8x48xf32>,
    %c1_30 = arith.constant 1 : index
    %c0_31 = arith.constant 0 : index
    %38 = vector.load %arg9[%c1_30, %c0_31] : memref<10x48xf32, #tpu.memory_space<vmem>>, vector<8x8xf32>
    %cst_32 = arith.constant dense<0xFF800000> : vector<8xf32>
    %39 = vector.multi_reduction <maximumf>, %38, %cst_32 [1] : vector<8x8xf32> to vector<8xf32>
    %40 = vector.shape_cast %39 : vector<8xf32> to vector<8x1xf32>
    %c0_33 = arith.constant 0 : index
    %c0_34 = arith.constant 0 : index
    %41 = vector.load %arg11[%c0_33, %c0_34] : memref<8x16xf32, #tpu.memory_space<vmem>>, vector<8x1xf32>
    tpu.vector_store %arg11[%c0_33, %c0_34], %40 {strides = array<i32>} : memref<8x16xf32, #tpu.memory_space<vmem>>, vector<8x1xf32>,
    %c1_35 = arith.constant 1 : index
    %c8 = arith.constant 8 : index
    %42 = vector.load %arg9[%c1_35, %c8] : memref<10x48xf32, #tpu.memory_space<vmem>>, vector<8x8xf32>
    %cst_36 = arith.constant dense<0xFF800000> : vector<8xf32>
    %43 = vector.multi_reduction <maximumf>, %42, %cst_36 [1] : vector<8x8xf32> to vector<8xf32>
    %44 = vector.shape_cast %43 : vector<8xf32> to vector<8x1xf32>
    %c0_37 = arith.constant 0 : index
    %c1_38 = arith.constant 1 : index
    %45 = vector.load %arg11[%c0_37, %c1_38] : memref<8x16xf32, #tpu.memory_space<vmem>>, vector<8x1xf32>
    tpu.vector_store %arg11[%c0_37, %c1_38], %44 {strides = array<i32>} : memref<8x16xf32, #tpu.memory_space<vmem>>, vector<8x1xf32>,
    %c1_39 = arith.constant 1 : index
    %c16 = arith.constant 16 : index
    %46 = vector.load %arg9[%c1_39, %c16] : memref<10x48xf32, #tpu.memory_space<vmem>>, vector<8x8xf32>
    %cst_40 = arith.constant dense<0xFF800000> : vector<8xf32>
    %47 = vector.multi_reduction <maximumf>, %46, %cst_40 [1] : vector<8x8xf32> to vector<8xf32>
    %48 = vector.shape_cast %47 : vector<8xf32> to vector<8x1xf32>
    %c0_41 = arith.constant 0 : index
    %c2_42 = arith.constant 2 : index
    %49 = vector.load %arg11[%c0_41, %c2_42] : memref<8x16xf32, #tpu.memory_space<vmem>>, vector<8x1xf32>
    tpu.vector_store %arg11[%c0_41, %c2_42], %48 {strides = array<i32>} : memref<8x16xf32, #tpu.memory_space<vmem>>, vector<8x1xf32>,
    %c1_43 = arith.constant 1 : index
    %c24 = arith.constant 24 : index
    %50 = vector.load %arg9[%c1_43, %c24] : memref<10x48xf32, #tpu.memory_space<vmem>>, vector<8x8xf32>
    %cst_44 = arith.constant dense<0xFF800000> : vector<8xf32>
    %51 = vector.multi_reduction <maximumf>, %50, %cst_44 [1] : vector<8x8xf32> to vector<8xf32>
    %52 = vector.shape_cast %51 : vector<8xf32> to vector<8x1xf32>
    %c0_45 = arith.constant 0 : index
    %c3_46 = arith.constant 3 : index
    %53 = vector.load %arg11[%c0_45, %c3_46] : memref<8x16xf32, #tpu.memory_space<vmem>>, vector<8x1xf32>
    tpu.vector_store %arg11[%c0_45, %c3_46], %52 {strides = array<i32>} : memref<8x16xf32, #tpu.memory_space<vmem>>, vector<8x1xf32>,
    %c1_47 = arith.constant 1 : index
    %c32 = arith.constant 32 : index
    %54 = vector.load %arg9[%c1_47, %c32] : memref<10x48xf32, #tpu.memory_space<vmem>>, vector<8x8xf32>
    %cst_48 = arith.constant dense<0xFF800000> : vector<8xf32>
    %55 = vector.multi_reduction <maximumf>, %54, %cst_48 [1] : vector<8x8xf32> to vector<8xf32>
    %56 = vector.shape_cast %55 : vector<8xf32> to vector<8x1xf32>
    %c0_49 = arith.constant 0 : index
    %c4_50 = arith.constant 4 : index
    %57 = vector.load %arg11[%c0_49, %c4_50] : memref<8x16xf32, #tpu.memory_space<vmem>>, vector<8x1xf32>
    tpu.vector_store %arg11[%c0_49, %c4_50], %56 {strides = array<i32>} : memref<8x16xf32, #tpu.memory_space<vmem>>, vector<8x1xf32>,
    %c1_51 = arith.constant 1 : index
    %c40 = arith.constant 40 : index
    %58 = vector.load %arg9[%c1_51, %c40] : memref<10x48xf32, #tpu.memory_space<vmem>>, vector<8x8xf32>
    %cst_52 = arith.constant dense<0xFF800000> : vector<8xf32>
    %59 = vector.multi_reduction <maximumf>, %58, %cst_52 [1] : vector<8x8xf32> to vector<8xf32>
    %60 = vector.shape_cast %59 : vector<8xf32> to vector<8x1xf32>
    %c0_53 = arith.constant 0 : index
    %c5_54 = arith.constant 5 : index
    %61 = vector.load %arg11[%c0_53, %c5_54] : memref<8x16xf32, #tpu.memory_space<vmem>>, vector<8x1xf32>
    tpu.vector_store %arg11[%c0_53, %c5_54], %60 {strides = array<i32>} : memref<8x16xf32, #tpu.memory_space<vmem>>, vector<8x1xf32>,
    %cst_55 = arith.constant 0.000000e+00 : f32
    %62 = vector.broadcast %cst_55 : f32 to vector<10x80xf32>
    %c0_56 = arith.constant 0 : index
    %c0_57 = arith.constant 0 : index
    %63 = vector.load %arg10[%c0_56, %c0_57] : memref<10x80xf32, #tpu.memory_space<vmem>>, vector<10x80xf32>
    tpu.vector_store %arg10[%c0_56, %c0_57], %62 {strides = array<i32>} : memref<10x80xf32, #tpu.memory_space<vmem>>, vector<10x80xf32>,
    %c0_58 = arith.constant 0 : index
    %c0_59 = arith.constant 0 : index
    %64 = vector.load %arg1[%c0_58, %c0_59] : memref<8x80xf32, #tpu.memory_space<vmem>>, vector<8x80xf32>
    %c1_60 = arith.constant 1 : index
    %c0_61 = arith.constant 0 : index
    %65 = vector.load %arg10[%c1_60, %c0_61] : memref<10x80xf32, #tpu.memory_space<vmem>>, vector<8x80xf32>
    tpu.vector_store %arg10[%c1_60, %c0_61], %64 {strides = array<i32>} : memref<10x80xf32, #tpu.memory_space<vmem>>, vector<8x80xf32>,
    %cst_62 = arith.constant 0.000000e+00 : f32
    %66 = vector.broadcast %cst_62 : f32 to vector<8x80xf32>
    %c0_63 = arith.constant 0 : index
    %c0_64 = arith.constant 0 : index
    %67 = vector.load %arg3[%c0_63, %c0_64] : memref<6x80xf32, #tpu.memory_space<vmem>>, vector<1x80xf32>
    %c0_65 = arith.constant 0 : index
    %c0_66 = arith.constant 0 : index
    %68 = vector.load %arg10[%c0_65, %c0_66] : memref<10x80xf32, #tpu.memory_space<vmem>>, vector<8x80xf32>
    %69 = vector.broadcast %67 : vector<1x80xf32> to vector<8x80xf32>
    %70 = arith.mulf %69, %68 : vector<8x80xf32>
    %71 = arith.addf %66, %70 : vector<8x80xf32>
    %c1_67 = arith.constant 1 : index
    %c0_68 = arith.constant 0 : index
    %72 = vector.load %arg3[%c1_67, %c0_68] : memref<6x80xf32, #tpu.memory_space<vmem>>, vector<1x80xf32>
    %c1_69 = arith.constant 1 : index
    %c0_70 = arith.constant 0 : index
    %73 = vector.load %arg10[%c1_69, %c0_70] : memref<10x80xf32, #tpu.memory_space<vmem>>, vector<8x80xf32>
    %74 = vector.broadcast %72 : vector<1x80xf32> to vector<8x80xf32>
    %75 = arith.mulf %74, %73 : vector<8x80xf32>
    %76 = arith.addf %71, %75 : vector<8x80xf32>
    %c2_71 = arith.constant 2 : index
    %c0_72 = arith.constant 0 : index
    %77 = vector.load %arg3[%c2_71, %c0_72] : memref<6x80xf32, #tpu.memory_space<vmem>>, vector<1x80xf32>
    %c2_73 = arith.constant 2 : index
    %c0_74 = arith.constant 0 : index
    %78 = vector.load %arg10[%c2_73, %c0_74] : memref<10x80xf32, #tpu.memory_space<vmem>>, vector<8x80xf32>
    %79 = vector.broadcast %77 : vector<1x80xf32> to vector<8x80xf32>
    %80 = arith.mulf %79, %78 : vector<8x80xf32>
    %81 = arith.addf %76, %80 : vector<8x80xf32>
    %c1_75 = arith.constant 1 : index
    %c0_76 = arith.constant 0 : index
    %82 = vector.load %arg10[%c1_75, %c0_76] : memref<10x80xf32, #tpu.memory_space<vmem>>, vector<8x80xf32>
    tpu.vector_store %arg10[%c1_75, %c0_76], %81 {strides = array<i32>} : memref<10x80xf32, #tpu.memory_space<vmem>>, vector<8x80xf32>,
    %cst_77 = arith.constant 0.000000e+00 : f32
    %83 = vector.broadcast %cst_77 : f32 to vector<8x80xf32>
    %c3_78 = arith.constant 3 : index
    %c0_79 = arith.constant 0 : index
    %84 = vector.load %arg3[%c3_78, %c0_79] : memref<6x80xf32, #tpu.memory_space<vmem>>, vector<1x80xf32>
    %c0_80 = arith.constant 0 : index
    %c0_81 = arith.constant 0 : index
    %85 = vector.load %arg10[%c0_80, %c0_81] : memref<10x80xf32, #tpu.memory_space<vmem>>, vector<8x80xf32>
    %86 = vector.broadcast %84 : vector<1x80xf32> to vector<8x80xf32>
    %87 = arith.mulf %86, %85 : vector<8x80xf32>
    %88 = arith.addf %83, %87 : vector<8x80xf32>
    %c4_82 = arith.constant 4 : index
    %c0_83 = arith.constant 0 : index
    %89 = vector.load %arg3[%c4_82, %c0_83] : memref<6x80xf32, #tpu.memory_space<vmem>>, vector<1x80xf32>
    %c1_84 = arith.constant 1 : index
    %c0_85 = arith.constant 0 : index
    %90 = vector.load %arg10[%c1_84, %c0_85] : memref<10x80xf32, #tpu.memory_space<vmem>>, vector<8x80xf32>
    %91 = vector.broadcast %89 : vector<1x80xf32> to vector<8x80xf32>
    %92 = arith.mulf %91, %90 : vector<8x80xf32>
    %93 = arith.addf %88, %92 : vector<8x80xf32>
    %c5_86 = arith.constant 5 : index
    %c0_87 = arith.constant 0 : index
    %94 = vector.load %arg3[%c5_86, %c0_87] : memref<6x80xf32, #tpu.memory_space<vmem>>, vector<1x80xf32>
    %c2_88 = arith.constant 2 : index
    %c0_89 = arith.constant 0 : index
    %95 = vector.load %arg10[%c2_88, %c0_89] : memref<10x80xf32, #tpu.memory_space<vmem>>, vector<8x80xf32>
    %96 = vector.broadcast %94 : vector<1x80xf32> to vector<8x80xf32>
    %97 = arith.mulf %96, %95 : vector<8x80xf32>
    %98 = arith.addf %93, %97 : vector<8x80xf32>
    %c1_90 = arith.constant 1 : index
    %c0_91 = arith.constant 0 : index
    %99 = vector.load %arg10[%c1_90, %c0_91] : memref<10x80xf32, #tpu.memory_space<vmem>>, vector<8x80xf32>
    tpu.vector_store %arg10[%c1_90, %c0_91], %98 {strides = array<i32>} : memref<10x80xf32, #tpu.memory_space<vmem>>, vector<8x80xf32>,
    %c1_92 = arith.constant 1 : index
    %c0_93 = arith.constant 0 : index
    %100 = vector.load %arg10[%c1_92, %c0_93] : memref<10x80xf32, #tpu.memory_space<vmem>>, vector<8x8xf32>
    %cst_94 = arith.constant dense<0xFF800000> : vector<8xf32>
    %101 = vector.multi_reduction <maximumf>, %100, %cst_94 [1] : vector<8x8xf32> to vector<8xf32>
    %102 = vector.shape_cast %101 : vector<8xf32> to vector<8x1xf32>
    %c0_95 = arith.constant 0 : index
    %c6 = arith.constant 6 : index
    %103 = vector.load %arg11[%c0_95, %c6] : memref<8x16xf32, #tpu.memory_space<vmem>>, vector<8x1xf32>
    tpu.vector_store %arg11[%c0_95, %c6], %102 {strides = array<i32>} : memref<8x16xf32, #tpu.memory_space<vmem>>, vector<8x1xf32>,
    %c1_96 = arith.constant 1 : index
    %c8_97 = arith.constant 8 : index
    %104 = vector.load %arg10[%c1_96, %c8_97] : memref<10x80xf32, #tpu.memory_space<vmem>>, vector<8x8xf32>
    %cst_98 = arith.constant dense<0xFF800000> : vector<8xf32>
    %105 = vector.multi_reduction <maximumf>, %104, %cst_98 [1] : vector<8x8xf32> to vector<8xf32>
    %106 = vector.shape_cast %105 : vector<8xf32> to vector<8x1xf32>
    %c0_99 = arith.constant 0 : index
    %c7 = arith.constant 7 : index
    %107 = vector.load %arg11[%c0_99, %c7] : memref<8x16xf32, #tpu.memory_space<vmem>>, vector<8x1xf32>
    tpu.vector_store %arg11[%c0_99, %c7], %106 {strides = array<i32>} : memref<8x16xf32, #tpu.memory_space<vmem>>, vector<8x1xf32>,
    %c1_100 = arith.constant 1 : index
    %c16_101 = arith.constant 16 : index
    %108 = vector.load %arg10[%c1_100, %c16_101] : memref<10x80xf32, #tpu.memory_space<vmem>>, vector<8x8xf32>
    %cst_102 = arith.constant dense<0xFF800000> : vector<8xf32>
    %109 = vector.multi_reduction <maximumf>, %108, %cst_102 [1] : vector<8x8xf32> to vector<8xf32>
    %110 = vector.shape_cast %109 : vector<8xf32> to vector<8x1xf32>
    %c0_103 = arith.constant 0 : index
    %c8_104 = arith.constant 8 : index
    %111 = vector.load %arg11[%c0_103, %c8_104] : memref<8x16xf32, #tpu.memory_space<vmem>>, vector<8x1xf32>
    tpu.vector_store %arg11[%c0_103, %c8_104], %110 {strides = array<i32>} : memref<8x16xf32, #tpu.memory_space<vmem>>, vector<8x1xf32>,
    %c1_105 = arith.constant 1 : index
    %c24_106 = arith.constant 24 : index
    %112 = vector.load %arg10[%c1_105, %c24_106] : memref<10x80xf32, #tpu.memory_space<vmem>>, vector<8x8xf32>
    %cst_107 = arith.constant dense<0xFF800000> : vector<8xf32>
    %113 = vector.multi_reduction <maximumf>, %112, %cst_107 [1] : vector<8x8xf32> to vector<8xf32>
    %114 = vector.shape_cast %113 : vector<8xf32> to vector<8x1xf32>
    %c0_108 = arith.constant 0 : index
    %c9 = arith.constant 9 : index
    %115 = vector.load %arg11[%c0_108, %c9] : memref<8x16xf32, #tpu.memory_space<vmem>>, vector<8x1xf32>
    tpu.vector_store %arg11[%c0_108, %c9], %114 {strides = array<i32>} : memref<8x16xf32, #tpu.memory_space<vmem>>, vector<8x1xf32>,
    %c1_109 = arith.constant 1 : index
    %c32_110 = arith.constant 32 : index
    %116 = vector.load %arg10[%c1_109, %c32_110] : memref<10x80xf32, #tpu.memory_space<vmem>>, vector<8x8xf32>
    %cst_111 = arith.constant dense<0xFF800000> : vector<8xf32>
    %117 = vector.multi_reduction <maximumf>, %116, %cst_111 [1] : vector<8x8xf32> to vector<8xf32>
    %118 = vector.shape_cast %117 : vector<8xf32> to vector<8x1xf32>
    %c0_112 = arith.constant 0 : index
    %c10 = arith.constant 10 : index
    %119 = vector.load %arg11[%c0_112, %c10] : memref<8x16xf32, #tpu.memory_space<vmem>>, vector<8x1xf32>
    tpu.vector_store %arg11[%c0_112, %c10], %118 {strides = array<i32>} : memref<8x16xf32, #tpu.memory_space<vmem>>, vector<8x1xf32>,
    %c1_113 = arith.constant 1 : index
    %c40_114 = arith.constant 40 : index
    %120 = vector.load %arg10[%c1_113, %c40_114] : memref<10x80xf32, #tpu.memory_space<vmem>>, vector<8x8xf32>
    %cst_115 = arith.constant dense<0xFF800000> : vector<8xf32>
    %121 = vector.multi_reduction <maximumf>, %120, %cst_115 [1] : vector<8x8xf32> to vector<8xf32>
    %122 = vector.shape_cast %121 : vector<8xf32> to vector<8x1xf32>
    %c0_116 = arith.constant 0 : index
    %c11 = arith.constant 11 : index
    %123 = vector.load %arg11[%c0_116, %c11] : memref<8x16xf32, #tpu.memory_space<vmem>>, vector<8x1xf32>
    tpu.vector_store %arg11[%c0_116, %c11], %122 {strides = array<i32>} : memref<8x16xf32, #tpu.memory_space<vmem>>, vector<8x1xf32>,
    %c1_117 = arith.constant 1 : index
    %c48 = arith.constant 48 : index
    %124 = vector.load %arg10[%c1_117, %c48] : memref<10x80xf32, #tpu.memory_space<vmem>>, vector<8x8xf32>
    %cst_118 = arith.constant dense<0xFF800000> : vector<8xf32>
    %125 = vector.multi_reduction <maximumf>, %124, %cst_118 [1] : vector<8x8xf32> to vector<8xf32>
    %126 = vector.shape_cast %125 : vector<8xf32> to vector<8x1xf32>
    %c0_119 = arith.constant 0 : index
    %c12 = arith.constant 12 : index
    %127 = vector.load %arg11[%c0_119, %c12] : memref<8x16xf32, #tpu.memory_space<vmem>>, vector<8x1xf32>
    tpu.vector_store %arg11[%c0_119, %c12], %126 {strides = array<i32>} : memref<8x16xf32, #tpu.memory_space<vmem>>, vector<8x1xf32>,
    %c1_120 = arith.constant 1 : index
    %c56 = arith.constant 56 : index
    %128 = vector.load %arg10[%c1_120, %c56] : memref<10x80xf32, #tpu.memory_space<vmem>>, vector<8x8xf32>
    %cst_121 = arith.constant dense<0xFF800000> : vector<8xf32>
    %129 = vector.multi_reduction <maximumf>, %128, %cst_121 [1] : vector<8x8xf32> to vector<8xf32>
    %130 = vector.shape_cast %129 : vector<8xf32> to vector<8x1xf32>
    %c0_122 = arith.constant 0 : index
    %c13 = arith.constant 13 : index
    %131 = vector.load %arg11[%c0_122, %c13] : memref<8x16xf32, #tpu.memory_space<vmem>>, vector<8x1xf32>
    tpu.vector_store %arg11[%c0_122, %c13], %130 {strides = array<i32>} : memref<8x16xf32, #tpu.memory_space<vmem>>, vector<8x1xf32>,
    %c1_123 = arith.constant 1 : index
    %c64 = arith.constant 64 : index
    %132 = vector.load %arg10[%c1_123, %c64] : memref<10x80xf32, #tpu.memory_space<vmem>>, vector<8x8xf32>
    %cst_124 = arith.constant dense<0xFF800000> : vector<8xf32>
    %133 = vector.multi_reduction <maximumf>, %132, %cst_124 [1] : vector<8x8xf32> to vector<8xf32>
    %134 = vector.shape_cast %133 : vector<8xf32> to vector<8x1xf32>
    %c0_125 = arith.constant 0 : index
    %c14 = arith.constant 14 : index
    %135 = vector.load %arg11[%c0_125, %c14] : memref<8x16xf32, #tpu.memory_space<vmem>>, vector<8x1xf32>
    tpu.vector_store %arg11[%c0_125, %c14], %134 {strides = array<i32>} : memref<8x16xf32, #tpu.memory_space<vmem>>, vector<8x1xf32>,
    %c1_126 = arith.constant 1 : index
    %c72 = arith.constant 72 : index
    %136 = vector.load %arg10[%c1_126, %c72] : memref<10x80xf32, #tpu.memory_space<vmem>>, vector<8x8xf32>
    %cst_127 = arith.constant dense<0xFF800000> : vector<8xf32>
    %137 = vector.multi_reduction <maximumf>, %136, %cst_127 [1] : vector<8x8xf32> to vector<8xf32>
    %138 = vector.shape_cast %137 : vector<8xf32> to vector<8x1xf32>
    %c0_128 = arith.constant 0 : index
    %c15 = arith.constant 15 : index
    %139 = vector.load %arg11[%c0_128, %c15] : memref<8x16xf32, #tpu.memory_space<vmem>>, vector<8x1xf32>
    tpu.vector_store %arg11[%c0_128, %c15], %138 {strides = array<i32>} : memref<8x16xf32, #tpu.memory_space<vmem>>, vector<8x1xf32>,
    %c0_129 = arith.constant 0 : index
    %c0_130 = arith.constant 0 : index
    %140 = vector.load %arg11[%c0_129, %c0_130] : memref<8x16xf32, #tpu.memory_space<vmem>>, vector<8x16xf32>
    %c0_131 = arith.constant 0 : index
    %c0_132 = arith.constant 0 : index
    %141 = vector.load %arg4[%c0_131, %c0_132] : memref<16x16xf32, #tpu.memory_space<vmem>>, vector<16x16xf32>
    %cst_133 = arith.constant dense<0.000000e+00> : vector<8x16xf32>
    %142 = tpu.matmul %140, %141, %cst_133 {dimension_numbers = #tpu.dot_dimension_numbers<[1], [0], [0], [1], [0, 0, 1, 1], [], []>} : vector<8x16xf32>, vector<16x16xf32>, vector<8x16xf32> -> vector<8x16xf32>
    %c0_134 = arith.constant 0 : index
    %c0_135 = arith.constant 0 : index
    %143 = vector.load %arg5[%c0_134, %c0_135] : memref<1x16xf32, #tpu.memory_space<vmem>>, vector<1x16xf32>
    %144 = vector.broadcast %143 : vector<1x16xf32> to vector<8x16xf32>
    %145 = arith.addf %142, %144 : vector<8x16xf32>
    %c0_136 = arith.constant 0 : index
    %c0_137 = arith.constant 0 : index
    %146 = vector.load %arg6[%c0_136, %c0_137] : memref<16x3xf32, #tpu.memory_space<vmem>>, vector<16x3xf32>
    %cst_138 = arith.constant dense<0.000000e+00> : vector<8x3xf32>
    %147 = tpu.matmul %145, %146, %cst_138 {dimension_numbers = #tpu.dot_dimension_numbers<[1], [0], [0], [1], [0, 0, 1, 1], [], []>} : vector<8x16xf32>, vector<16x3xf32>, vector<8x3xf32> -> vector<8x3xf32>
    %c0_139 = arith.constant 0 : index
    %c0_140 = arith.constant 0 : index
    %148 = vector.load %arg7[%c0_139, %c0_140] : memref<1x3xf32, #tpu.memory_space<vmem>>, vector<1x3xf32>
    %149 = vector.broadcast %148 : vector<1x3xf32> to vector<8x3xf32>
    %150 = arith.addf %147, %149 : vector<8x3xf32>
    %c0_141 = arith.constant 0 : index
    %c0_142 = arith.constant 0 : index
    %151 = vector.load %arg8[%c0_141, %c0_142] : memref<8x3xf32, #tpu.memory_space<vmem>>, vector<8x3xf32>
    tpu.vector_store %arg8[%c0_141, %c0_142], %150 {strides = array<i32>} : memref<8x3xf32, #tpu.memory_space<vmem>>, vector<8x3xf32>,
    return
  }
}

</mosaic_0001>

<llo_original>
// kernel: tile.29
$region0: #{tile.29}
  %s0 = inlined_call_operand.vmem [shape: f32[3,6,8], index: 0, kind: input, shape index: {}]
  %s1 = inlined_call_operand.vmem [shape: f32[3,48], index: 1, kind: output, shape index: {}]
  $region1: #{tile.29} parent=0
    #allocation0 [shape = 'u8[4096]{0}', space=vmem, size = 0x1000, scoped, tag = 'scoped mem for output reshape']
    %v2 = vld [vmem:[%s0] ss:$8 sm:$0x7]
    %vm3 = vcmask 64512
    %4 = vst.msk [vmem:[#allocation0] sm:$0x7] %vm3, %v2
    %s5 = scalar_lea.vmem %s0, 5
    %v6 = vld [vmem:[%s5] ss:$8 sm:$0x7]
    %7 = vrot.lane.b32.xlu0 %v6, 40
    %v8 = vpop.permute.xlu0 %7
    %vm9 = vcmask 392512
    %10 = vst.msk [vmem:[#allocation0] sm:$0x7] %vm9, %v8
    %s11 = scalar_lea.vmem %s0, 4
    %v12 = vld [vmem:[%s11] ss:$8 sm:$0x7]
    %13 = vrot.lane.b32.xlu0 %v12, 32
    %v14 = vpop.permute.xlu0 %13
    %vm15 = vcmask 326912
    %16 = vst.msk [vmem:[#allocation0] sm:$0x7] %vm15, %v14
    %s17 = scalar_lea.vmem %s0, 3
    %v18 = vld [vmem:[%s17] ss:$8 sm:$0x7]
    %19 = vrot.lane.b32.xlu0 %v18, 24
    %v20 = vpop.permute.xlu0 %19
    %vm21 = vcmask 261312
    %22 = vst.msk [vmem:[#allocation0] sm:$0x7] %vm21, %v20
    %s23 = scalar_lea.vmem %s0, 2
    %v24 = vld [vmem:[%s23] ss:$8 sm:$0x7]
    %25 = vrot.lane.b32.xlu0 %v24, 16
    %v26 = vpop.permute.xlu0 %25
    %vm27 = vcmask 195712
    %28 = vst.msk [vmem:[#allocation0] sm:$0x7] %vm27, %v26
    %s29 = scalar_lea.vmem %s0, 1
    %v30 = vld [vmem:[%s29] ss:$8 sm:$0x7]
    %31 = vrot.lane.b32.xlu0 %v30, 8
    %v32 = vpop.permute.xlu0 %31
    %vm33 = vcmask 130112
    %34 = vst.msk [vmem:[#allocation0] sm:$0x7] %vm33, %v32
    %s36 = sshllo.u32 0, 4
    %v38 = vld [vmem:[#allocation0] sm:%s36]
    %s39 = sshllo.u32 0, 4
    %40 = vst [vmem:[%s1] sm:%s39] %v38

// kernel: tile.39
$region0: #{tile.39}
  %s0 = inlined_call_operand.vmem [shape: f32[3,10,8], index: 0, kind: input, shape index: {}]
  %s1 = inlined_call_operand.vmem [shape: f32[3,80], index: 1, kind: output, shape index: {}]
  $region1: #{tile.39} parent=0
    #allocation0 [shape = 'u8[4096]{0}', space=vmem, size = 0x1000, scoped, tag = 'scoped mem for output reshape']
    %s2 = smov 3
    %v3 = vld [vmem:[%s0] ss:$16 sm:%s2]
    %s4 = scalar_lea.vmem %s0, 30
    %v5 = vld [vmem:[%s4] sm:$0x4]
    %vm6 = vcmask 1042434
    %v7 = vsel %vm6, %v5, %v3
    %vm8 = vcmask 64512
    %9 = vst.msk [vmem:[#allocation0] sm:$0x7] %vm8, %v7
    %s10 = scalar_lea.vmem %s0, 9
    %s11 = smov 3
    %v12 = vld [vmem:[%s10] ss:$16 sm:%s11]
    %s13 = scalar_lea.vmem %s0, 39
    %v14 = vld [vmem:[%s13] sm:$0x4]
    %vm15 = vcmask 1042434
    %v16 = vsel %vm15, %v14, %v12
    %17 = vrot.lane.b32.xlu0 %v16, 72
    %v18 = vpop.permute.xlu0 %17
    %vm19 = vcmask 654912
    %20 = vst.msk [vmem:[#allocation0] sm:$0x7] %vm19, %v18
    %s21 = scalar_lea.vmem %s0, 8
    %s22 = smov 3
    %v23 = vld [vmem:[%s21] ss:$16 sm:%s22]
    %s24 = scalar_lea.vmem %s0, 38
    %v25 = vld [vmem:[%s24] sm:$0x4]
    %vm26 = vcmask 1042434
    %v27 = vsel %vm26, %v25, %v23
    %28 = vrot.lane.b32.xlu0 %v27, 64
    %v29 = vpop.permute.xlu0 %28
    %vm30 = vcmask 589312
    %31 = vst.msk [vmem:[#allocation0] sm:$0x7] %vm30, %v29
    %s32 = scalar_lea.vmem %s0, 7
    %s33 = smov 3
    %v34 = vld [vmem:[%s32] ss:$16 sm:%s33]
    %s35 = scalar_lea.vmem %s0, 37
    %v36 = vld [vmem:[%s35] sm:$0x4]
    %vm37 = vcmask 1042434
    %v38 = vsel %vm37, %v36, %v34
    %39 = vrot.lane.b32.xlu0 %v38, 56
    %v40 = vpop.permute.xlu0 %39
    %vm41 = vcmask 523712
    %42 = vst.msk [vmem:[#allocation0] sm:$0x7] %vm41, %v40
    %s43 = scalar_lea.vmem %s0, 6
    %s44 = smov 3
    %v45 = vld [vmem:[%s43] ss:$16 sm:%s44]
    %s46 = scalar_lea.vmem %s0, 36
    %v47 = vld [vmem:[%s46] sm:$0x4]
    %vm48 = vcmask 1042434
    %v49 = vsel %vm48, %v47, %v45
    %50 = vrot.lane.b32.xlu0 %v49, 48
    %v51 = vpop.permute.xlu0 %50
    %vm52 = vcmask 458112
    %53 = vst.msk [vmem:[#allocation0] sm:$0x7] %vm52, %v51
    %s54 = scalar_lea.vmem %s0, 5
    %s55 = smov 3
    %v56 = vld [vmem:[%s54] ss:$16 sm:%s55]
    %s57 = scalar_lea.vmem %s0, 35
    %v58 = vld [vmem:[%s57] sm:$0x4]
    %vm59 = vcmask 1042434
    %v60 = vsel %vm59, %v58, %v56
    %61 = vrot.lane.b32.xlu0 %v60, 40
    %v62 = vpop.permute.xlu0 %61
    %vm63 = vcmask 392512
    %64 = vst.msk [vmem:[#allocation0] sm:$0x7] %vm63, %v62
    %s65 = scalar_lea.vmem %s0, 4
    %s66 = smov 3
    %v67 = vld [vmem:[%s65] ss:$16 sm:%s66]
    %s68 = scalar_lea.vmem %s0, 34
    %v69 = vld [vmem:[%s68] sm:$0x4]
    %vm70 = vcmask 1042434
    %v71 = vsel %vm70, %v69, %v67
    %72 = vrot.lane.b32.xlu0 %v71, 32
    %v73 = vpop.permute.xlu0 %72
    %vm74 = vcmask 326912
    %75 = vst.msk [vmem:[#allocation0] sm:$0x7] %vm74, %v73
    %s76 = scalar_lea.vmem %s0, 3
    %s77 = smov 3
    %v78 = vld [vmem:[%s76] ss:$16 sm:%s77]
    %s79 = scalar_lea.vmem %s0, 33
    %v80 = vld [vmem:[%s79] sm:$0x4]
    %vm81 = vcmask 1042434
    %v82 = vsel %vm81, %v80, %v78
    %83 = vrot.lane.b32.xlu0 %v82, 24
    %v84 = vpop.permute.xlu0 %83
    %vm85 = vcmask 261312
    %86 = vst.msk [vmem:[#allocation0] sm:$0x7] %vm85, %v84
    %s87 = scalar_lea.vmem %s0, 2
    %s88 = smov 3
    %v89 = vld [vmem:[%s87] ss:$16 sm:%s88]
    %s90 = scalar_lea.vmem %s0, 32
    %v91 = vld [vmem:[%s90] sm:$0x4]
    %vm92 = vcmask 1042434
    %v93 = vsel %vm92, %v91, %v89
    %94 = vrot.lane.b32.xlu0 %v93, 16
    %v95 = vpop.permute.xlu0 %94
    %vm96 = vcmask 195712
    %97 = vst.msk [vmem:[#allocation0] sm:$0x7] %vm96, %v95
    %s98 = scalar_lea.vmem %s0, 1
    %s99 = smov 3
    %v100 = vld [vmem:[%s98] ss:$16 sm:%s99]
    %s101 = scalar_lea.vmem %s0, 31
    %v102 = vld [vmem:[%s101] sm:$0x4]
    %vm103 = vcmask 1042434
    %v104 = vsel %vm103, %v102, %v100
    %105 = vrot.lane.b32.xlu0 %v104, 8
    %v106 = vpop.permute.xlu0 %105
    %vm107 = vcmask 130112
    %108 = vst.msk [vmem:[#allocation0] sm:$0x7] %vm107, %v106
    %s110 = sshllo.u32 0, 4
    %v112 = vld [vmem:[#allocation0] sm:%s110]
    %s113 = sshllo.u32 0, 4
    %114 = vst [vmem:[%s1] sm:%s113] %v112

// kernel: cnn_forward.1
$region0: #{cnn_forward.1}
  #allocation0 [shape = 'u32[]', space=smem, size = 0x4, offset = 0x4, fixed_abs, tag = 'smem constant byte address 0x4 - core index']
  #allocation1 [shape = 'u32[144,128]{1,0:T(1,128)}', space=vmem, size = 0x12000, scoped, tag = 'internal scratch']
  #allocation2 [shape = 'f32[10,48]{1,0:T(8,128)}', space=vmem, size = 0x2000, scoped, tag = 'scratch operand']
  #allocation3 [shape = 'f32[10,80]{1,0:T(8,128)}', space=vmem, size = 0x2000, scoped, tag = 'scratch operand']
  #allocation4 [shape = 'f32[8,16]{1,0:T(8,128)}', space=vmem, size = 0x1000, scoped, tag = 'scratch operand']
  %s0 = inlined_call_operand.vmem [shape: f32[8,48], index: 0, kind: input, shape index: {}]
  %s1 = inlined_call_operand.vmem [shape: f32[8,80], index: 1, kind: input, shape index: {}]
  %s2 = inlined_call_operand.vmem [shape: f32[6,48], index: 2, kind: input, shape index: {}]
  %s3 = inlined_call_operand.vmem [shape: f32[6,80], index: 3, kind: input, shape index: {}]
  %s4 = inlined_call_operand.vmem [shape: f32[16,16], index: 4, kind: input, shape index: {}]
  %s5 = inlined_call_operand.vmem [shape: f32[1,16], index: 5, kind: input, shape index: {}]
  %s6 = inlined_call_operand.vmem [shape: f32[16,3], index: 6, kind: input, shape index: {}]
  %s7 = inlined_call_operand.vmem [shape: f32[1,3], index: 7, kind: input, shape index: {}]
  %s8 = inlined_call_operand.vmem [shape: f32[8,3], index: 8, kind: output, shape index: {}]
  %s9 = sld [smem:[#allocation0]]
  $region42: #{cnn_forward.1} parent=0
    _
  %s11 = ssub.s32 1, %s9
  %s12 = scalar_select 0, %s11, %s9
  // Predicated region
  $region2: #{cnn_forward.1} parent=0 // pred_check
    _
  $region3: #{cnn_forward.1} parent=0 // pred_check_branch
    %14 = sbr.rel (0) target = $region5
  $region4: #{cnn_forward.1} parent=0 // pred_region
    _
  $region5: #{cnn_forward.1} parent=0 // pred_fallthru
    _
  // Predicated region
  $region6: #{cnn_forward.1} parent=0 // pred_check
    _
  $region7: #{cnn_forward.1} parent=0 // pred_check_branch
    %16 = sbr.rel (0) target = $region9
  $region8: #{cnn_forward.1} parent=0 // pred_region
    _
  $region9: #{cnn_forward.1} parent=0 // pred_fallthru
    _
  // Predicated region
  $region10: #{cnn_forward.1} parent=0 // pred_check
    _
  $region11: #{cnn_forward.1} parent=0 // pred_check_branch
    %18 = sbr.rel (0) target = $region13
  $region12: #{cnn_forward.1} parent=0 // pred_region
    _
  $region13: #{cnn_forward.1} parent=0 // pred_fallthru
    _
  // Predicated region
  $region14: #{cnn_forward.1} parent=0 // pred_check
    _
  $region15: #{cnn_forward.1} parent=0 // pred_check_branch
    %20 = sbr.rel (0) target = $region17
  $region16: #{cnn_forward.1} parent=0 // pred_region
    _
  $region17: #{cnn_forward.1} parent=0 // pred_fallthru
    _
  // Predicated region
  $region18: #{cnn_forward.1} parent=0 // pred_check
    _
  $region19: #{cnn_forward.1} parent=0 // pred_check_branch
    %22 = sbr.rel (0) target = $region21
  $region20: #{cnn_forward.1} parent=0 // pred_region
    _
  $region21: #{cnn_forward.1} parent=0 // pred_fallthru
    _
  // Predicated region
  $region22: #{cnn_forward.1} parent=0 // pred_check
    _
  $region23: #{cnn_forward.1} parent=0 // pred_check_branch
    %24 = sbr.rel (0) target = $region25
  $region24: #{cnn_forward.1} parent=0 // pred_region
    _
  $region25: #{cnn_forward.1} parent=0 // pred_fallthru
    _
  // Predicated region
  $region26: #{cnn_forward.1} parent=0 // pred_check
    _
  $region27: #{cnn_forward.1} parent=0 // pred_check_branch
    %26 = sbr.rel (0) target = $region29
  $region28: #{cnn_forward.1} parent=0 // pred_region
    _
  $region29: #{cnn_forward.1} parent=0 // pred_fallthru
    _
  // Predicated region
  $region30: #{cnn_forward.1} parent=0 // pred_check
    _
  $region31: #{cnn_forward.1} parent=0 // pred_check_branch
    %28 = sbr.rel (0) target = $region33
  $region32: #{cnn_forward.1} parent=0 // pred_region
    _
  $region33: #{cnn_forward.1} parent=0 // pred_fallthru
    _
  %vm29 = vcmask 392192
  %30 = vst.msk [vmem:[#allocation2] sm:$0xff] %vm29, 0.0
  %vm31 = vcmask 386048
  %32 = vst.msk [vmem:[#allocation2 + $0x8] sm:$0x3] %vm31, 0.0
  %v33 = vld [vmem:[%s0] sm:$0xff]
  %34 = vst.msk [vmem:[#allocation2 + $0x1] sm:$0xff] %vm29, %v33
  %v35 = vld [vmem:[%s2] sm:$0x1]
  %v36 = vld [vmem:[#allocation2] sm:$0xff]
  %v37 = vlaneseq
  %v38 = vshrl.u32 %v37, 7
  %v39 = vsub.s32 0, %v38
  %v40 = vrot.slane %v35, %v39
  %v41 = vmul.f32 %v40, %v36
  %v42 = vadd.f32 %v41, 0.0
  %v43 = vld [vmem:[%s2 + $0x1] sm:$0x1]
  %v44 = vld [vmem:[#allocation2 + $0x1] sm:$0xff]
  %v45 = vlaneseq
  %v46 = vshrl.u32 %v45, 7
  %v47 = vsub.s32 0, %v46
  %v48 = vrot.slane %v43, %v47
  %v49 = vmul.f32 %v48, %v44
  %v50 = vadd.f32 %v42, %v49
  %v51 = vld [vmem:[%s2 + $0x2] sm:$0x1]
  %v52 = vld [vmem:[#allocation2 + $0x2] sm:$0xff]
  %v53 = vlaneseq
  %v54 = vshrl.u32 %v53, 7
  %v55 = vsub.s32 0, %v54
  %v56 = vrot.slane %v51, %v55
  %v57 = vmul.f32 %v56, %v52
  %v58 = vadd.f32 %v50, %v57
  %59 = vst.msk [vmem:[#allocation2 + $0x1] sm:$0xff] %vm29, %v58
  %v60 = vld [vmem:[%s2 + $0x3] sm:$0x1]
  %v61 = vld [vmem:[#allocation2] sm:$0xff]
  %v62 = vlaneseq
  %v63 = vshrl.u32 %v62, 7
  %v64 = vsub.s32 0, %v63
  %v65 = vrot.slane %v60, %v64
  %v66 = vmul.f32 %v65, %v61
  %v67 = vadd.f32 %v66, 0.0
  %v68 = vld [vmem:[%s2 + $0x4] sm:$0x1]
  %v69 = vld [vmem:[#allocation2 + $0x1] sm:$0xff]
  %v70 = vlaneseq
  %v71 = vshrl.u32 %v70, 7
  %v72 = vsub.s32 0, %v71
  %v73 = vrot.slane %v68, %v72
  %v74 = vmul.f32 %v73, %v69
  %v75 = vadd.f32 %v67, %v74
  %v76 = vld [vmem:[%s2 + $0x5] sm:$0x1]
  %v77 = vld [vmem:[#allocation2 + $0x2] sm:$0xff]
  %v78 = vlaneseq
  %v79 = vshrl.u32 %v78, 7
  %v80 = vsub.s32 0, %v79
  %v81 = vrot.slane %v76, %v80
  %v82 = vmul.f32 %v81, %v77
  %v83 = vadd.f32 %v75, %v82
  %84 = vst.msk [vmem:[#allocation2 + $0x1] sm:$0xff] %vm29, %v83
  %v85 = vld [vmem:[#allocation2 + $0x1] sm:$0xff]
  %vm86 = vcmask 64512
  %v87 = vsel %vm86, %v85, -inf
  %88 = vmax.xlane.f32.xlu0 %v87
  %v89 = vpop.xlane.xlu0 %88
  %vm90 = vcmask 7168
  %91 = vst.msk [vmem:[#allocation4] sm:$0xff] %vm90, %v89
  %v92 = vld [vmem:[#allocation2 + $0x1] sm:$0xff]
  %vm93 = vcmask 130112
  %v94 = vsel %vm93, %v92, -inf
  %95 = vmax.xlane.f32.xlu0 %v94
  %v96 = vpop.xlane.xlu0 %95
  %vm97 = vcmask 15368
  %98 = vst.msk [vmem:[#allocation4] sm:$0xff] %vm97, %v96
  %v99 = vld [vmem:[#allocation2 + $0x1] sm:$0xff]
  %vm100 = vcmask 195712
  %v101 = vsel %vm100, %v99, -inf
  %102 = vmax.xlane.f32.xlu0 %v101
  %v103 = vpop.xlane.xlu0 %102
  %vm104 = vcmask 23568
  %105 = vst.msk [vmem:[#allocation4] sm:$0xff] %vm104, %v103
  %v106 = vld [vmem:[#allocation2 + $0x1] sm:$0xff]
  %vm107 = vcmask 261312
  %v108 = vsel %vm107, %v106, -inf
  %109 = vmax.xlane.f32.xlu0 %v108
  %v110 = vpop.xlane.xlu0 %109
  %vm111 = vcmask 31768
  %112 = vst.msk [vmem:[#allocation4] sm:$0xff] %vm111, %v110
  %v113 = vld [vmem:[#allocation2 + $0x1] sm:$0xff]
  %vm114 = vcmask 326912
  %v115 = vsel %vm114, %v113, -inf
  %116 = vmax.xlane.f32.xlu0 %v115
  %v117 = vpop.xlane.xlu0 %116
  %vm118 = vcmask 39968
  %119 = vst.msk [vmem:[#allocation4] sm:$0xff] %vm118, %v117
  %v120 = vld [vmem:[#allocation2 + $0x1] sm:$0xff]
  %vm121 = vcmask 392512
  %v122 = vsel %vm121, %v120, -inf
  %123 = vmax.xlane.f32.xlu0 %v122
  %v124 = vpop.xlane.xlu0 %123
  %vm125 = vcmask 48168
  %126 = vst.msk [vmem:[#allocation4] sm:$0xff] %vm125, %v124
  %vm127 = vcmask 654336
  %128 = vst.msk [vmem:[#allocation3] sm:$0xff] %vm127, 0.0
  %vm129 = vcmask 648192
  %130 = vst.msk [vmem:[#allocation3 + $0x8] sm:$0x3] %vm129, 0.0
  %v131 = vld [vmem:[%s1] sm:$0xff]
  %132 = vst.msk [vmem:[#allocation3 + $0x1] sm:$0xff] %vm127, %v131
  %v133 = vld [vmem:[%s3] sm:$0x1]
  %v134 = vld [vmem:[#allocation3] sm:$0xff]
  %v135 = vlaneseq
  %v136 = vshrl.u32 %v135, 7
  %v137 = vsub.s32 0, %v136
  %v138 = vrot.slane %v133, %v137
  %v139 = vmul.f32 %v138, %v134
  %v140 = vadd.f32 %v139, 0.0
  %v141 = vld [vmem:[%s3 + $0x1] sm:$0x1]
  %v142 = vld [vmem:[#allocation3 + $0x1] sm:$0xff]
  %v143 = vlaneseq
  %v144 = vshrl.u32 %v143, 7
  %v145 = vsub.s32 0, %v144
  %v146 = vrot.slane %v141, %v145
  %v147 = vmul.f32 %v146, %v142
  %v148 = vadd.f32 %v140, %v147
  %v149 = vld [vmem:[%s3 + $0x2] sm:$0x1]
  %v150 = vld [vmem:[#allocation3 + $0x2] sm:$0xff]
  %v151 = vlaneseq
  %v152 = vshrl.u32 %v151, 7
  %v153 = vsub.s32 0, %v152
  %v154 = vrot.slane %v149, %v153
  %v155 = vmul.f32 %v154, %v150
  %v156 = vadd.f32 %v148, %v155
  %157 = vst.msk [vmem:[#allocation3 + $0x1] sm:$0xff] %vm127, %v156
  %v158 = vld [vmem:[%s3 + $0x3] sm:$0x1]
  %v159 = vld [vmem:[#allocation3] sm:$0xff]
  %v160 = vlaneseq
  %v161 = vshrl.u32 %v160, 7
  %v162 = vsub.s32 0, %v161
  %v163 = vrot.slane %v158, %v162
  %v164 = vmul.f32 %v163, %v159
  %v165 = vadd.f32 %v164, 0.0
  %v166 = vld [vmem:[%s3 + $0x4] sm:$0x1]
  %v167 = vld [vmem:[#allocation3 + $0x1] sm:$0xff]
  %v168 = vlaneseq
  %v169 = vshrl.u32 %v168, 7
  %v170 = vsub.s32 0, %v169
  %v171 = vrot.slane %v166, %v170
  %v172 = vmul.f32 %v171, %v167
  %v173 = vadd.f32 %v165, %v172
  %v174 = vld [vmem:[%s3 + $0x5] sm:$0x1]
  %v175 = vld [vmem:[#allocation3 + $0x2] sm:$0xff]
  %v176 = vlaneseq
  %v177 = vshrl.u32 %v176, 7
  %v178 = vsub.s32 0, %v177
  %v179 = vrot.slane %v174, %v178
  %v180 = vmul.f32 %v179, %v175
  %v181 = vadd.f32 %v173, %v180
  %182 = vst.msk [vmem:[#allocation3 + $0x1] sm:$0xff] %vm127, %v181
  %v183 = vld [vmem:[#allocation3 + $0x1] sm:$0xff]
  %v184 = vsel %vm86, %v183, -inf
  %185 = vmax.xlane.f32.xlu0 %v184
  %v186 = vpop.xlane.xlu0 %185
  %vm187 = vcmask 56368
  %188 = vst.msk [vmem:[#allocation4] sm:$0xff] %vm187, %v186
  %v189 = vld [vmem:[#allocation3 + $0x1] sm:$0xff]
  %v190 = vsel %vm93, %v189, -inf
  %191 = vmax.xlane.f32.xlu0 %v190
  %v192 = vpop.xlane.xlu0 %191
  %vm193 = vcmask 64568
  %194 = vst.msk [vmem:[#allocation4] sm:$0xff] %vm193, %v192
  %v195 = vld [vmem:[#allocation3 + $0x1] sm:$0xff]
  %v196 = vsel %vm100, %v195, -inf
  %197 = vmax.xlane.f32.xlu0 %v196
  %v198 = vpop.xlane.xlu0 %197
  %vm199 = vcmask 72768
  %200 = vst.msk [vmem:[#allocation4] sm:$0xff] %vm199, %v198
  %v201 = vld [vmem:[#allocation3 + $0x1] sm:$0xff]
  %v202 = vsel %vm107, %v201, -inf
  %203 = vmax.xlane.f32.xlu0 %v202
  %v204 = vpop.xlane.xlu0 %203
  %vm205 = vcmask 80968
  %206 = vst.msk [vmem:[#allocation4] sm:$0xff] %vm205, %v204
  %v207 = vld [vmem:[#allocation3 + $0x1] sm:$0xff]
  %v208 = vsel %vm114, %v207, -inf
  %209 = vmax.xlane.f32.xlu0 %v208
  %v210 = vpop.xlane.xlu0 %209
  %vm211 = vcmask 89168
  %212 = vst.msk [vmem:[#allocation4] sm:$0xff] %vm211, %v210
  %v213 = vld [vmem:[#allocation3 + $0x1] sm:$0xff]
  %v214 = vsel %vm121, %v213, -inf
  %215 = vmax.xlane.f32.xlu0 %v214
  %v216 = vpop.xlane.xlu0 %215
  %vm217 = vcmask 97368
  %218 = vst.msk [vmem:[#allocation4] sm:$0xff] %vm217, %v216
  %v219 = vld [vmem:[#allocation3 + $0x1] sm:$0xff]
  %vm220 = vcmask 458112
  %v221 = vsel %vm220, %v219, -inf
  %222 = vmax.xlane.f32.xlu0 %v221
  %v223 = vpop.xlane.xlu0 %222
  %vm224 = vcmask 105568
  %225 = vst.msk [vmem:[#allocation4] sm:$0xff] %vm224, %v223
  %v226 = vld [vmem:[#allocation3 + $0x1] sm:$0xff]
  %vm227 = vcmask 523712
  %v228 = vsel %vm227, %v226, -inf
  %229 = vmax.xlane.f32.xlu0 %v228
  %v230 = vpop.xlane.xlu0 %229
  %vm231 = vcmask 113768
  %232 = vst.msk [vmem:[#allocation4] sm:$0xff] %vm231, %v230
  %v233 = vld [vmem:[#allocation3 + $0x1] sm:$0xff]
  %vm234 = vcmask 589312
  %v235 = vsel %vm234, %v233, -inf
  %236 = vmax.xlane.f32.xlu0 %v235
  %v237 = vpop.xlane.xlu0 %236
  %vm238 = vcmask 121968
  %239 = vst.msk [vmem:[#allocation4] sm:$0xff] %vm238, %v237
  %v240 = vld [vmem:[#allocation3 + $0x1] sm:$0xff]
  %vm241 = vcmask 654912
  %v242 = vsel %vm241, %v240, -inf
  %243 = vmax.xlane.f32.xlu0 %v242
  %v244 = vpop.xlane.xlu0 %243
  %vm245 = vcmask 130168
  %246 = vst.msk [vmem:[#allocation4] sm:$0xff] %vm245, %v244
  %v247 = vld [vmem:[#allocation4] sm:$0xff]
  %v248 = vld [vmem:[%s4] sm:$0xff]
  %v249 = vld [vmem:[%s4 + $0x8] sm:$0xff]
  %v250 = vld [vmem:[%s5] sm:$0x1]
  %v252 = vlaneseq
  %v253 = vshrl.u32 %v252, 7
  %v254 = vsub.s32 0, %v253
  %v255 = vrot.slane %v250, %v254
  %vm257 = vcmask 130048
  %v259 = vsel %vm257, %v247, 0
  %261 = vmatprep.subr.mxu0 0.0
  %262 = vmatpush1.msra.mxu0 %v248
  %263 = vmatprep.subr.mxu0 0.0
  %264 = vmatpush1.msra.mxu0 %v249
  %265 = vmatprep.subr.mxu0 0.0
  %266 = vmatpush1.msra.mxu0 0.0
  %267 = vmatprep.subr.mxu0 0.0
  %268 = vmatpush1.msra.mxu0 0.0
  %269 = vmatprep.subr.mxu0 0.0
  %270 = vmatpush1.msra.mxu0 0.0
  %271 = vmatprep.subr.mxu0 0.0
  %272 = vmatpush1.msra.mxu0 0.0
  %273 = vmatprep.subr.mxu0 0.0
  %274 = vmatpush1.msra.mxu0 0.0
  %275 = vmatprep.subr.mxu0 0.0
  %276 = vmatpush1.msra.mxu0 0.0
  %277 = vmatprep.subr.mxu0 0.0
  %278 = vmatpush1.msra.mxu0 0.0
  %279 = vmatprep.subr.mxu0 0.0
  %280 = vmatpush1.msra.mxu0 0.0
  %281 = vmatprep.subr.mxu0 0.0
  %282 = vmatpush1.msra.mxu0 0.0
  %283 = vmatprep.subr.mxu0 0.0
  %284 = vmatpush1.msra.mxu0 0.0
  %285 = vmatprep.subr.mxu0 0.0
  %286 = vmatpush1.msra.mxu0 0.0
  %287 = vmatprep.subr.mxu0 0.0
  %288 = vmatpush1.msra.mxu0 0.0
  %289 = vmatprep.subr.mxu0 0.0
  %290 = vmatpush1.msra.mxu0 0.0
  %291 = vmatprep.subr.mxu0 0.0
  %292 = vmatpush1.msra.mxu0 0.0
  %293 = vmatprep.subr.mxu0 0.0
  %294 = vmatpush1.msra.mxu0 0.0
  %295 = vmatprep.subr.mxu0 0.0
  %296 = vmatpush1.msra.mxu0 0.0
  %297 = vmatprep.subr.mxu0 0.0
  %298 = vmatpush1.msra.mxu0 0.0
  %299 = vmatprep.subr.mxu0 0.0
  %300 = vmatpush1.msra.mxu0 0.0
  %301 = vmatprep.subr.mxu0 0.0
  %302 = vmatpush1.msra.mxu0 0.0
  %303 = vmatprep.subr.mxu0 0.0
  %304 = vmatpush1.msra.mxu0 0.0
  %305 = vmatprep.subr.mxu0 0.0
  %306 = vmatpush1.msra.mxu0 0.0
  %307 = vmatprep.subr.mxu0 0.0
  %308 = vmatpush1.msra.mxu0 0.0
  %309 = vmatprep.subr.mxu0 0.0
  %310 = vmatpush1.msra.mxu0 0.0
  %311 = vmatprep.subr.mxu0 0.0
  %312 = vmatpush1.msra.mxu0 0.0
  %313 = vmatprep.subr.mxu0 0.0
  %314 = vmatpush1.msra.mxu0 0.0
  %315 = vmatprep.subr.mxu0 0.0
  %316 = vmatpush1.msra.mxu0 0.0
  %317 = vmatprep.subr.mxu0 0.0
  %318 = vmatpush1.msra.mxu0 0.0
  %319 = vmatprep.subr.mxu0 0.0
  %320 = vmatpush1.msra.mxu0 0.0
  %321 = vmatprep.subr.mxu0 0.0
  %322 = vmatpush1.msra.mxu0 0.0
  %323 = vmatprep.subr.mxu0 0.0
  %324 = vmatpush1.msra.mxu0 0.0
  %325 = vmatprep.mubr.f32.mxu0 0.0
  %326 = vmatmul.mubr.f32.gmra.mrb[0].mxu0 %v259
  %v327 = vpop.f32.mrb[0].mxu0
  %v328 = vadd.f32 %v255, %v327
  %v329 = vpop.f32.mrb[0].mxu0
  %330 = vdwg.mxu0
  %v331 = vld [vmem:[%s6] sm:$0xff]
  %v332 = vld [vmem:[%s6 + $0x8] sm:$0xff]
  %v333 = vld [vmem:[%s7] sm:$0x1]
  %v335 = vlaneseq
  %v336 = vshrl.u32 %v335, 7
  %v337 = vsub.s32 0, %v336
  %v338 = vrot.slane %v333, %v337
  %v341 = vsel %vm257, %v328, 0
  %343 = vmatprep.subr.mxu0 0.0
  %344 = vmatpush1.msra.mxu0 %v331
  %345 = vmatprep.subr.mxu0 0.0
  %346 = vmatpush1.msra.mxu0 %v332
  %347 = vmatprep.subr.mxu0 0.0
  %348 = vmatpush1.msra.mxu0 0.0
  %349 = vmatprep.subr.mxu0 0.0
  %350 = vmatpush1.msra.mxu0 0.0
  %351 = vmatprep.subr.mxu0 0.0
  %352 = vmatpush1.msra.mxu0 0.0
  %353 = vmatprep.subr.mxu0 0.0
  %354 = vmatpush1.msra.mxu0 0.0
  %355 = vmatprep.subr.mxu0 0.0
  %356 = vmatpush1.msra.mxu0 0.0
  %357 = vmatprep.subr.mxu0 0.0
  %358 = vmatpush1.msra.mxu0 0.0
  %359 = vmatprep.subr.mxu0 0.0
  %360 = vmatpush1.msra.mxu0 0.0
  %361 = vmatprep.subr.mxu0 0.0
  %362 = vmatpush1.msra.mxu0 0.0
  %363 = vmatprep.subr.mxu0 0.0
  %364 = vmatpush1.msra.mxu0 0.0
  %365 = vmatprep.subr.mxu0 0.0
  %366 = vmatpush1.msra.mxu0 0.0
  %367 = vmatprep.subr.mxu0 0.0
  %368 = vmatpush1.msra.mxu0 0.0
  %369 = vmatprep.subr.mxu0 0.0
  %370 = vmatpush1.msra.mxu0 0.0
  %371 = vmatprep.subr.mxu0 0.0
  %372 = vmatpush1.msra.mxu0 0.0
  %373 = vmatprep.subr.mxu0 0.0
  %374 = vmatpush1.msra.mxu0 0.0
  %375 = vmatprep.subr.mxu0 0.0
  %376 = vmatpush1.msra.mxu0 0.0
  %377 = vmatprep.subr.mxu0 0.0
  %378 = vmatpush1.msra.mxu0 0.0
  %379 = vmatprep.subr.mxu0 0.0
  %380 = vmatpush1.msra.mxu0 0.0
  %381 = vmatprep.subr.mxu0 0.0
  %382 = vmatpush1.msra.mxu0 0.0
  %383 = vmatprep.subr.mxu0 0.0
  %384 = vmatpush1.msra.mxu0 0.0
  %385 = vmatprep.subr.mxu0 0.0
  %386 = vmatpush1.msra.mxu0 0.0
  %387 = vmatprep.subr.mxu0 0.0
  %388 = vmatpush1.msra.mxu0 0.0
  %389 = vmatprep.subr.mxu0 0.0
  %390 = vmatpush1.msra.mxu0 0.0
  %391 = vmatprep.subr.mxu0 0.0
  %392 = vmatpush1.msra.mxu0 0.0
  %393 = vmatprep.subr.mxu0 0.0
  %394 = vmatpush1.msra.mxu0 0.0
  %395 = vmatprep.subr.mxu0 0.0
  %396 = vmatpush1.msra.mxu0 0.0
  %397 = vmatprep.subr.mxu0 0.0
  %398 = vmatpush1.msra.mxu0 0.0
  %399 = vmatprep.subr.mxu0 0.0
  %400 = vmatpush1.msra.mxu0 0.0
  %401 = vmatprep.subr.mxu0 0.0
  %402 = vmatpush1.msra.mxu0 0.0
  %403 = vmatprep.subr.mxu0 0.0
  %404 = vmatpush1.msra.mxu0 0.0
  %405 = vmatprep.subr.mxu0 0.0
  %406 = vmatpush1.msra.mxu0 0.0
  %407 = vmatprep.mubr.f32.mxu0 0.0
  %408 = vmatmul.mubr.f32.gmra.mrb[0].mxu0 %v341
  %v409 = vpop.f32.mrb[0].mxu0
  %v410 = vadd.f32 %v338, %v409
  %v411 = vpop.f32.mrb[0].mxu0
  %412 = vdwg.mxu0
  %vm413 = vcmask 23552
  %414 = vst.msk [vmem:[%s8] sm:$0xff] %vm413, %v410
  // Predicated region
  $region34: #{cnn_forward.1} parent=0 // pred_check
    _
  $region35: #{cnn_forward.1} parent=0 // pred_check_branch
    %416 = sbr.rel (0) target = $region37
  $region36: #{cnn_forward.1} parent=0 // pred_region
    _
  $region37: #{cnn_forward.1} parent=0 // pred_fallthru
    _
  // Predicated region
  $region38: #{cnn_forward.1} parent=0 // pred_check
    _
  $region39: #{cnn_forward.1} parent=0 // pred_check_branch
    %418 = sbr.rel (0) target = $region41
  $region40: #{cnn_forward.1} parent=0 // pred_region
    _
  $region41: #{cnn_forward.1} parent=0 // pred_fallthru
    _

</llo_original>
